<compile_context>
chip_gen: v6e
topology: v6e:2x2x1
jax: 0.10.0
libtpu: 0.0.40
codegen_flags: <defaults>
</compile_context>

<pallas_src>
import functools

import jax
import jax.numpy as jnp
from jax import lax
from jax.experimental import pallas as pl
from jax.experimental.pallas import tpu as pltpu


# --------------------------------------------------------------------------
# helpers
# --------------------------------------------------------------------------
def _round_up(x, m):
    return ((x + m - 1) // m) * m


def _vmem_capacity_bytes():
    try:
        return int(pltpu.get_tpu_info().vmem_capacity_bytes)
    except Exception:
        return 64 * 1024 * 1024  # conservative (v7x-sized) fallback


def _default_tile_prefs():
    """Per-generation tile preferences + VMEM budget."""
    cap = _vmem_capacity_bytes()
    if cap >= 100 * 1024 * 1024:
        # v5e / v6e: 128 MiB physical VMEM -> big tiles for MXU-roofline reuse.
        return 512, 1024, 1024, min(96 * 1024 * 1024, int(cap * 0.75))
    # v7x: 64 MiB physical VMEM per TensorCore -> smaller budget, 512-ish tiles
    # already reach its ~310 flop/byte roofline.
    return 512, 512, 1024, min(48 * 1024 * 1024, int(cap * 0.75))


def _pick_tile(dim, preferred, align):
    """Tile (multiple of `align`, <= `preferred` unless the whole padded dim is
    smaller) and padded dim (multiple of the tile).  `preferred` must be a
    multiple of `align`."""
    padded_min = _round_up(dim, align)
    if padded_min <= preferred:
        return padded_min, padded_min
    return preferred, _round_up(dim, preferred)


def _pick_m_tile(m, preferred, align):
    """Like _pick_tile but tries to avoid padding M entirely by picking a tile
    that divides M exactly (saves a wrapper-side pad + slice HBM pass)."""
    m_aligned = _round_up(m, align)
    if m_aligned <= preferred:
        return m_aligned, m_aligned
    if m % align == 0:
        cand = preferred
        while cand >= align:
            if m % cand == 0:
                return cand, m
            cand -= align
    return preferred, _round_up(m, preferred)


# --------------------------------------------------------------------------
# Pallas kernel: tiled matmul (x @ W) + bias, bf16 MXU operands, f32 accum
# --------------------------------------------------------------------------
def _matmul_bias_kernel(x_ref, w_ref, b_ref, o_ref, acc_ref, *, compute_dtype):
    # x_ref  : (tm, tk)  activation tile (original dtype; cast in-kernel)
    # w_ref  : (tk, tn)  pre-transposed, pre-cast weight tile
    # b_ref  : (1, tn)   bias tile (f32)
    # o_ref  : (tm, tn)  output tile
    # acc_ref: (tm, tn)  f32 VMEM accumulator, resident across the K axis
    k = pl.program_id(2)

    @pl.when(k == 0)
    def _():
        acc_ref[...] = jnp.zeros_like(acc_ref)

    x_tile = x_ref[...].astype(compute_dtype)
    acc_ref[...] += jnp.dot(
        x_tile, w_ref[...], preferred_element_type=jnp.float32
    )

    @pl.when(k == pl.num_programs(2) - 1)
    def _():
        o_ref[...] = (acc_ref[...] + b_ref[...]).astype(o_ref.dtype)


def _pallas_matmul_bias(x_pad, w_pad, b_pad, tm, tn, tk, out_dtype,
                        compute_dtype, vmem_budget):
    """y_pad = x_pad @ w_pad + b_pad on a tiled (M, N, K) grid.

    x_pad: (M_pad, K_pad); w_pad: (K_pad, N_pad); b_pad: (1, N_pad) f32.
    All padded dims are exact multiples of their tile sizes.
    """
    m_pad, k_pad = x_pad.shape
    n_pad = w_pad.shape[1]
    grid = (m_pad // tm, n_pad // tn, k_pad // tk)

    x_bytes = jnp.dtype(x_pad.dtype).itemsize
    w_bytes = jnp.dtype(w_pad.dtype).itemsize
    out_bytes = jnp.dtype(out_dtype).itemsize

    # bytes_accessed counts operand RE-reads across the tiled grid.
    bytes_accessed = (
        m_pad * k_pad * x_bytes * (n_pad // tn)       # x read once per N tile
        + k_pad * n_pad * w_bytes * (m_pad // tm)     # W read once per M tile
        + n_pad * 4 * (m_pad // tm)                   # bias re-reads
        + m_pad * n_pad * out_bytes                   # output written once
    )
    cost = pl.CostEstimate(
        flops=2 * m_pad * n_pad * k_pad,
        transcendentals=0,
        bytes_accessed=bytes_accessed,
    )

    # Double-buffered VMEM footprint + headroom, clamped to the per-gen budget.
    footprint = (
        2 * tm * tk * x_bytes        # x tiles
        + 2 * tk * tn * w_bytes      # W tiles
        + 2 * tn * 4                 # bias tiles
        + tm * tn * 4                # f32 accumulator
        + 2 * tm * tn * out_bytes    # output tiles
    )
    vmem_limit = max(32 * 1024 * 1024, int(footprint * 1.5) + (4 << 20))
    vmem_limit = min(vmem_limit, vmem_budget)
    vmem_limit = max(vmem_limit, footprint + (2 << 20))  # never below footprint

    kernel = functools.partial(_matmul_bias_kernel, compute_dtype=compute_dtype)

    return pl.pallas_call(
        kernel,
        out_shape=jax.ShapeDtypeStruct((m_pad, n_pad), out_dtype),
        grid_spec=pltpu.PrefetchScalarGridSpec(
            num_scalar_prefetch=0,
            grid=grid,
            in_specs=[
                pl.BlockSpec((tm, tk), lambda i, j, k: (i, k)),   # x
                pl.BlockSpec((tk, tn), lambda i, j, k: (k, j)),   # W [in,out]
                pl.BlockSpec((1, tn), lambda i, j, k: (0, j)),    # bias
            ],
            out_specs=pl.BlockSpec((tm, tn), lambda i, j, k: (i, j)),
            scratch_shapes=[pltpu.VMEM((tm, tn), jnp.float32)],
        ),
        compiler_params=pltpu.CompilerParams(
            dimension_semantics=("parallel", "parallel", "arbitrary"),
            vmem_limit_bytes=int(vmem_limit),
        ),
        cost_estimate=cost,
    )(x_pad, w_pad, b_pad)


# --------------------------------------------------------------------------
# relocate_activations + Module_with_relocation equivalents
# --------------------------------------------------------------------------
def relocate_activations(x, allgather_group=None, slice_func=None):
    if allgather_group is None and slice_func is None:
        return x
    if slice_func is not None:
        x = slice_func(x)
    if allgather_group is not None:
        # TODO(synk): cross-device allgather not exercised (group is None).
        x = allgather_group(x)
    return x


class ModuleWithRelocation:
    """JAX equivalent of Module_with_relocation wrapping a Linear module."""

    def __init__(self, weight, bias, allgather_group=None, slice_func=None,
                 compute_dtype=jnp.bfloat16, tm_pref=None, tn_pref=None,
                 tk_pref=None):
        # weight: (H_out, H_in) PyTorch nn.Linear layout; bias: (H_out,)
        self.allgather_group = allgather_group
        self.slice_func = slice_func
        self.out_features, self.in_features = weight.shape
        self.compute_dtype = (jnp.dtype(compute_dtype)
                              if compute_dtype is not None
                              else jnp.dtype(weight.dtype))

        d_tm, d_tn, d_tk, vmem_budget = _default_tile_prefs()
        self.tm_pref = tm_pref if tm_pref is not None else d_tm
        tn_pref = tn_pref if tn_pref is not None else d_tn
        tk_pref = tk_pref if tk_pref is not None else d_tk
        self.vmem_budget = vmem_budget

        # bf16 needs a 16-row sublane minimum for the second-minor dim.
        self.m_align = 16 if jnp.dtype(self.compute_dtype).itemsize < 4 else 8

        # N / K tile choices depend only on the weight shape -> decide once.
        self.tn, n_pad = _pick_tile(self.out_features, tn_pref, 128)
        self.tk, k_pad = _pick_tile(self.in_features, tk_pref, 128)

        # Pad + transpose + cast the weight ONCE at init: [K_pad, N_pad],
        # lane-dense, zero-padded, compute dtype (bf16 by default).
        w_t = jnp.asarray(weight).T.astype(self.compute_dtype)
        self.weight_padded = (
            jnp.zeros((k_pad, n_pad), self.compute_dtype)
            .at[: self.in_features, : self.out_features]
            .set(w_t)
        )
        self.bias_padded = (
            jnp.zeros((1, n_pad), jnp.float32)
            .at[0, : self.out_features]
            .set(jnp.asarray(bias).astype(jnp.float32))
        )

    def _inner_module(self, x):
        # wrapped module: Linear over the last axis of [B, S, H_in]
        B, S, H = x.shape
        assert H == self.in_features
        out_dtype = x.dtype

        M = B * S
        tm, m_pad = _pick_m_tile(M, self.tm_pref, self.m_align)
        k_pad = self.weight_padded.shape[0]
        n_pad = self.weight_padded.shape[1]

        x2d = x.reshape(M, H)
        if (m_pad, k_pad) != (M, H):
            x2d = jnp.pad(x2d, ((0, m_pad - M), (0, k_pad - H)))

        y_pad = _pallas_matmul_bias(
            x2d, self.weight_padded, self.bias_padded,
            tm, self.tn, self.tk, out_dtype, self.compute_dtype,
            self.vmem_budget,
        )
        if (m_pad, n_pad) != (M, self.out_features):
            y_pad = y_pad[:M, : self.out_features]
        return y_pad.reshape(B, S, self.out_features)

    def __call__(self, *inputs):
        inputs_relocated = tuple(
            relocate_activations(i, self.allgather_group, self.slice_func)
            for i in inputs
        )
        return self._inner_module(*inputs_relocated)


# --------------------------------------------------------------------------
if __name__ == "__main__":
    key = jax.random.PRNGKey(0)
    k_x, k_w, k_b, k_x2, k_w2, k_b2 = jax.random.split(key, 6)

    # --- small demo shapes consistent with the module's forward -------------
    B, S, H = 2, 8, 32
    x = jax.random.normal(k_x, (B, S, H), dtype=jnp.float32)
    weight = jax.random.normal(k_w, (H, H), dtype=jnp.float32) * 0.05
    bias = jax.random.normal(k_b, (H,), dtype=jnp.float32) * 0.01

    mod = ModuleWithRelocation(weight, bias, allgather_group=None,
                               slice_func=None)
    out = jax.block_until_ready(mod(x))

    ref = (
        jnp.einsum("bsh,oh->bso", x, weight, precision=lax.Precision.HIGHEST)
        + bias
    )
    assert out.shape == (B, S, H)
    # bf16 operands, f32 accumulation
    assert jnp.allclose(out, ref, atol=2e-2, rtol=2e-2)

    # --- larger shape: exercises the multi-step K reduction / accumulator ---
    B2, S2, H2 = 2, 128, 1024
    x2 = jax.random.normal(k_x2, (B2, S2, H2), dtype=jnp.float32)
    weight2 = jax.random.normal(k_w2, (H2, H2), dtype=jnp.float32) * 0.02
    bias2 = jax.random.normal(k_b2, (H2,), dtype=jnp.float32) * 0.01

    # force multi-tile N / K so the accumulator + pl.when paths are exercised
    mod2 = ModuleWithRelocation(weight2, bias2, allgather_group=None,
                                slice_func=None, tn_pref=512, tk_pref=512)
    out2 = jax.block_until_ready(mod2(x2))

    ref2 = (
        jnp.einsum("bsh,oh->bso", x2, weight2, precision=lax.Precision.HIGHEST)
        + bias2
    )
    assert out2.shape == (B2, S2, H2)
    assert jnp.allclose(out2, ref2, atol=5e-2, rtol=5e-2)

    print("KERNEL_OK")
</pallas_src>

<mosaic_0001>
module attributes {stable_mosaic.version = 11 : i64} {
  func.func @_matmul_bias_kernel(%arg0: i32, %arg1: i32, %arg2: i32, %arg3: memref<16x128xf32, #tpu.memory_space<vmem>>, %arg4: memref<128x128xbf16, #tpu.memory_space<vmem>>, %arg5: memref<1x128xf32, #tpu.memory_space<vmem>>, %arg6: memref<16x128xf32, #tpu.memory_space<vmem>>, %arg7: memref<16x128xf32, #tpu.memory_space<vmem>>) attributes {dimension_semantics = [#tpu.dimension_semantics<parallel>, #tpu.dimension_semantics<parallel>, #tpu.dimension_semantics<arbitrary>], iteration_bounds = array<i64: 1, 1, 1>, scalar_prefetch = 0 : i64, scratch_operands = 1 : i64, tpu.core_type = #tpu.core_type<tc>, window_params = [{transform_indices = @transform_0, window_bounds = array<i64: 16, 128>}, {transform_indices = @transform_1, window_bounds = array<i64: 128, 128>}, {transform_indices = @transform_2, window_bounds = array<i64: 1, 128>}, {transform_indices = @transform_3, window_bounds = array<i64: 16, 128>}]} {
    %c0_i32 = arith.constant 0 : i32
    %0 = arith.cmpi eq, %arg2, %c0_i32 : i32
    %1 = arith.extui %0 : i1 to i32
    %c0_i32_0 = arith.constant 0 : i32
    %2 = arith.cmpi ne, %1, %c0_i32_0 : i32
    scf.if %2 {
      %cst_10 = arith.constant 0.000000e+00 : f32
      %13 = vector.broadcast %cst_10 : f32 to vector<16x128xf32>
      %c0_11 = arith.constant 0 : index
      %c0_12 = arith.constant 0 : index
      %14 = vector.load %arg7[%c0_11, %c0_12] : memref<16x128xf32, #tpu.memory_space<vmem>>, vector<16x128xf32>
      tpu.vector_store %arg7[%c0_11, %c0_12], %13 {strides = array<i32>} : memref<16x128xf32, #tpu.memory_space<vmem>>, vector<16x128xf32>,
    } else {
    }
    %c0 = arith.constant 0 : index
    %c0_1 = arith.constant 0 : index
    %3 = vector.load %arg3[%c0, %c0_1] : memref<16x128xf32, #tpu.memory_space<vmem>>, vector<16x128xf32>
    %4 = arith.truncf %3 : vector<16x128xf32> to vector<16x128xbf16>
    %c0_2 = arith.constant 0 : index
    %c0_3 = arith.constant 0 : index
    %5 = vector.load %arg7[%c0_2, %c0_3] : memref<16x128xf32, #tpu.memory_space<vmem>>, vector<16x128xf32>
    %c0_4 = arith.constant 0 : index
    %c0_5 = arith.constant 0 : index
    %6 = vector.load %arg4[%c0_4, %c0_5] : memref<128x128xbf16, #tpu.memory_space<vmem>>, vector<128x128xbf16>
    %cst = arith.constant dense<0.000000e+00> : vector<16x128xf32>
    %7 = tpu.matmul %4, %6, %cst {dimension_numbers = #tpu.dot_dimension_numbers<[1], [0], [0], [1], [0, 0, 1, 1], [], []>} : vector<16x128xbf16>, vector<128x128xbf16>, vector<16x128xf32> -> vector<16x128xf32>
    %8 = arith.addf %5, %7 : vector<16x128xf32>
    %c0_6 = arith.constant 0 : index
    %c0_7 = arith.constant 0 : index
    %9 = vector.load %arg7[%c0_6, %c0_7] : memref<16x128xf32, #tpu.memory_space<vmem>>, vector<16x128xf32>
    tpu.vector_store %arg7[%c0_6, %c0_7], %8 {strides = array<i32>} : memref<16x128xf32, #tpu.memory_space<vmem>>, vector<16x128xf32>,
    %c0_i32_8 = arith.constant 0 : i32
    %10 = arith.cmpi eq, %arg2, %c0_i32_8 : i32
    %11 = arith.extui %10 : i1 to i32
    %c0_i32_9 = arith.constant 0 : i32
    %12 = arith.cmpi ne, %11, %c0_i32_9 : i32
    scf.if %12 {
      %c0_10 = arith.constant 0 : index
      %c0_11 = arith.constant 0 : index
      %13 = vector.load %arg7[%c0_10, %c0_11] : memref<16x128xf32, #tpu.memory_space<vmem>>, vector<16x128xf32>
      %c0_12 = arith.constant 0 : index
      %c0_13 = arith.constant 0 : index
      %14 = vector.load %arg5[%c0_12, %c0_13] : memref<1x128xf32, #tpu.memory_space<vmem>>, vector<1x128xf32>
      %15 = vector.broadcast %14 : vector<1x128xf32> to vector<16x128xf32>
      %16 = arith.addf %13, %15 : vector<16x128xf32>
      %c0_14 = arith.constant 0 : index
      %c0_15 = arith.constant 0 : index
      %17 = vector.load %arg6[%c0_14, %c0_15] : memref<16x128xf32, #tpu.memory_space<vmem>>, vector<16x128xf32>
      tpu.vector_store %arg6[%c0_14, %c0_15], %16 {strides = array<i32>} : memref<16x128xf32, #tpu.memory_space<vmem>>, vector<16x128xf32>,
    } else {
    }
    return
  }
  func.func @transform_0(%arg0: i32, %arg1: i32, %arg2: i32) -> (i32, i32) {
    %c0_i32 = arith.constant 0 : i32
    return %arg0, %arg2 : i32, i32
  }
  func.func @transform_1(%arg0: i32, %arg1: i32, %arg2: i32) -> (i32, i32) {
    %c0_i32 = arith.constant 0 : i32
    return %arg2, %arg1 : i32, i32
  }
  func.func @transform_2(%arg0: i32, %arg1: i32, %arg2: i32) -> (i32, i32) {
    %c0_i32 = arith.constant 0 : i32
    %c0_i32_0 = arith.constant 0 : i32
    return %c0_i32, %arg1 : i32, i32
  }
  func.func @transform_3(%arg0: i32, %arg1: i32, %arg2: i32) -> (i32, i32) {
    %c0_i32 = arith.constant 0 : i32
    return %arg0, %arg1 : i32, i32
  }
}

</mosaic_0001>

<llo_original>
// kernel: tpu_custom_call.1
$region0: #{tpu_custom_call.1}
  #allocation0 [shape = 'u32[]', space=smem, size = 0x4, offset = 0x4, fixed_abs, tag = 'smem constant byte address 0x4 - core index']
  #allocation1 [shape = 'u32[144,128]{1,0:T(1,128)}', space=vmem, size = 0x12000, scoped, tag = 'internal scratch']
  #allocation2 [shape = 'f32[16,128]{1,0:T(8,128)}', space=vmem, size = 0x2000, scoped, tag = 'scratch operand']
  %s0 = inlined_call_operand.hbm [shape: f32[16,128], index: 0, kind: input, shape index: {}]
  %s1 = inlined_call_operand.hbm [shape: bf16[128,128], index: 1, kind: input, shape index: {}]
  %s2 = inlined_call_operand.vmem [shape: f32[1,128], index: 2, kind: input, shape index: {}]
  %s3 = inlined_call_operand.hbm [shape: f32[16,128], index: 3, kind: output, shape index: {}]
  %s4 = sld [smem:[#allocation0]]
  $region38: #{tpu_custom_call.1} parent=0
    _
  %s6 = ssub.s32 1, %s4
  %s7 = scalar_select 0, %s6, %s4
  $region1: #{tpu_custom_call.1} parent=0
    #allocation3 [shape = 'u8[8192]{0}', space=vmem, size = 0x2000, scoped, tag = 'input window, operand 0, single buffered']
    #allocation4 [shape = 's32[1]{0}', space=sflag, size = 0x4, scoped, tag = 'scoped memory for tpu_custom_call.1']
    #allocation5 [shape = 's32[1]{0}', space=sflag, size = 0x4, scoped, tag = 'scoped memory for tpu_custom_call.1']
    #allocation6 [shape = 'u8[32768]{0}', space=vmem, size = 0x8000, scoped, tag = 'input window, operand 1, single buffered']
    #allocation7 [shape = 's32[1]{0}', space=sflag, size = 0x4, scoped, tag = 'scoped memory for tpu_custom_call.1']
    #allocation8 [shape = 'u8[8192]{0}', space=vmem, size = 0x2000, scoped, tag = 'output window, operand 0, single buffered']
    %8 = vsyncpa [#allocation4], 0
    %9 = vsyncpa [#allocation7], 0
    %10 = vsyncpa [#allocation5], 0
    // Predicated region
    $region2: #{tpu_custom_call.1} parent=1 // pred_check
      _
    $region3: #{tpu_custom_call.1} parent=1 // pred_check_branch
      %12 = sbr.rel (0) target = $region5
    $region4: #{tpu_custom_call.1} parent=1 // pred_region
      %s14 = ssub.s32 256, 256
      %15 = vsyncadd [#allocation4], %s14
      %s16 = sshll.u32 [#allocation3], 4
      %s17 = int_to_ptr.vmem [resolvable:$true] %s16
      %22 = dma.hbm_to_vmem [thread:$0]  %s0, 256, %s17, [#allocation4], 128, 128, 8
    $region5: #{tpu_custom_call.1} parent=1 // pred_fallthru
      _
    // Predicated region
    $region6: #{tpu_custom_call.1} parent=1 // pred_check
      _
    $region7: #{tpu_custom_call.1} parent=1 // pred_check_branch
      %24 = sbr.rel (0) target = $region9
    $region8: #{tpu_custom_call.1} parent=1 // pred_region
      %s26 = ssub.s32 1024, 1024
      %27 = vsyncadd [#allocation7], %s26
      %s28 = sshll.u32 [#allocation6], 4
      %s29 = int_to_ptr.vmem [resolvable:$true] %s28
      %34 = dma.hbm_to_vmem [thread:$0]  %s1, 1024, %s29, [#allocation7], 64, 64, 4
    $region9: #{tpu_custom_call.1} parent=1 // pred_fallthru
      _
    // Predicated region
    $region10: #{tpu_custom_call.1} parent=1 // pred_check
      _
    $region11: #{tpu_custom_call.1} parent=1 // pred_check_branch
      %36 = sbr.rel (0) target = $region13
    $region12: #{tpu_custom_call.1} parent=1 // pred_region
      _
    $region13: #{tpu_custom_call.1} parent=1 // pred_fallthru
      _
    // Predicated region
    $region14: #{tpu_custom_call.1} parent=1 // pred_check
      _
    $region15: #{tpu_custom_call.1} parent=1 // pred_check_branch
      %38 = sbr.rel (0) target = $region17
    $region16: #{tpu_custom_call.1} parent=1 // pred_region
      %39 = dma.done [#allocation4], 256
    $region17: #{tpu_custom_call.1} parent=1 // pred_fallthru
      _
    // Predicated region
    $region18: #{tpu_custom_call.1} parent=1 // pred_check
      _
    $region19: #{tpu_custom_call.1} parent=1 // pred_check_branch
      %41 = sbr.rel (0) target = $region21
    $region20: #{tpu_custom_call.1} parent=1 // pred_region
      %42 = dma.done [#allocation7], 1024
    $region21: #{tpu_custom_call.1} parent=1 // pred_fallthru
      _
    %p44 = scmp.eq.s32.totalorder 0, 0
    // Predicated region
    $region22: #{tpu_custom_call.1} parent=1 // pred_check
      %p45 = pneg %p44
    $region23: #{tpu_custom_call.1} parent=1 // pred_check_branch
      %47 = sbr.rel (%p45) target = $region25
    $region24: #{tpu_custom_call.1} parent=1 // pred_region
      %48 = vst [vmem:[#allocation2] sm:$0xff] 0.0
      %49 = vst [vmem:[#allocation2 + $0x8] sm:$0xff] 0.0
    $region25: #{tpu_custom_call.1} parent=1 // pred_fallthru
      _
    %v50 = vld [vmem:[#allocation3] sm:$0xff]
    %v51 = vld [vmem:[#allocation3 + $0x8] sm:$0xff]
    %v52 = vpack.c.bf16 %v51, %v50
    %v53 = vld [vmem:[#allocation2] sm:$0xff]
    %v54 = vld [vmem:[#allocation2 + $0x8] sm:$0xff]
    %v55 = vld [vmem:[#allocation6] sm:$0xf]
    %v56 = vld [vmem:[#allocation6 + $0x4] sm:$0xf]
    %v57 = vld [vmem:[#allocation6 + $0x8] sm:$0xf]
    %v58 = vld [vmem:[#allocation6 + $0xc] sm:$0xf]
    %v59 = vld [vmem:[#allocation6 + $0x10] sm:$0xf]
    %v60 = vld [vmem:[#allocation6 + $0x14] sm:$0xf]
    %v61 = vld [vmem:[#allocation6 + $0x18] sm:$0xf]
    %v62 = vld [vmem:[#allocation6 + $0x1c] sm:$0xf]
    %v63 = vld [vmem:[#allocation6 + $0x20] sm:$0xf]
    %v64 = vld [vmem:[#allocation6 + $0x24] sm:$0xf]
    %v65 = vld [vmem:[#allocation6 + $0x28] sm:$0xf]
    %v66 = vld [vmem:[#allocation6 + $0x2c] sm:$0xf]
    %v67 = vld [vmem:[#allocation6 + $0x30] sm:$0xf]
    %v68 = vld [vmem:[#allocation6 + $0x34] sm:$0xf]
    %v69 = vld [vmem:[#allocation6 + $0x38] sm:$0xf]
    %v70 = vld [vmem:[#allocation6 + $0x3c] sm:$0xf]
    %v87 = vunpack.c.l.b16 %v55
    %v88 = vunpack.c.l.b16 %v56
    %v89 = vunpack.c.l.b16 %v57
    %v90 = vunpack.c.l.b16 %v58
    %v91 = vunpack.c.l.b16 %v59
    %v92 = vunpack.c.l.b16 %v60
    %v93 = vunpack.c.l.b16 %v61
    %v94 = vunpack.c.l.b16 %v62
    %v95 = vunpack.c.l.b16 %v63
    %v96 = vunpack.c.l.b16 %v64
    %v97 = vunpack.c.l.b16 %v65
    %v98 = vunpack.c.l.b16 %v66
    %v99 = vunpack.c.l.b16 %v67
    %v100 = vunpack.c.l.b16 %v68
    %v101 = vunpack.c.l.b16 %v69
    %v102 = vunpack.c.l.b16 %v70
    %v103 = vpack.c.b16 %v88, %v87
    %v104 = vpack.c.b16 %v90, %v89
    %v105 = vpack.c.b16 %v92, %v91
    %v106 = vpack.c.b16 %v94, %v93
    %v107 = vpack.c.b16 %v96, %v95
    %v108 = vpack.c.b16 %v98, %v97
    %v109 = vpack.c.b16 %v100, %v99
    %v110 = vpack.c.b16 %v102, %v101
    %119 = vmatprep.subr.bf16.mxu0 0
    %120 = vmatpush1.bf16.msra.mxu0 %v110
    %121 = vmatprep.subr.bf16.mxu0 0
    %122 = vmatpush1.bf16.msra.mxu0 %v109
    %123 = vmatprep.subr.bf16.mxu0 0
    %124 = vmatpush1.bf16.msra.mxu0 %v108
    %125 = vmatprep.subr.bf16.mxu0 0
    %126 = vmatpush1.bf16.msra.mxu0 %v107
    %127 = vmatprep.subr.bf16.mxu0 0
    %128 = vmatpush1.bf16.msra.mxu0 %v106
    %129 = vmatprep.subr.bf16.mxu0 0
    %130 = vmatpush1.bf16.msra.mxu0 %v105
    %131 = vmatprep.subr.bf16.mxu0 0
    %132 = vmatpush1.bf16.msra.mxu0 %v104
    %133 = vmatprep.subr.bf16.mxu0 0
    %134 = vmatpush1.bf16.msra.mxu0 %v103
    %135 = vmatprep.subr.bf16.mxu0 0
    %136 = vmatpush2.bf16.msra.mxu0 0
    %137 = vmatprep.subr.bf16.mxu0 0
    %138 = vmatpush2.bf16.msra.mxu0 0
    %139 = vmatprep.subr.bf16.mxu0 0
    %140 = vmatpush2.bf16.msra.mxu0 0
    %141 = vmatprep.subr.bf16.mxu0 0
    %142 = vmatpush2.bf16.msra.mxu0 0
    %143 = vmatprep.subr.bf16.mxu0 0
    %144 = vmatpush2.bf16.msra.mxu0 0
    %145 = vmatprep.subr.bf16.mxu0 0
    %146 = vmatpush2.bf16.msra.mxu0 0
    %147 = vmatprep.subr.bf16.mxu0 0
    %148 = vmatpush2.bf16.msra.mxu0 0
    %149 = vmatprep.subr.bf16.mxu0 0
    %150 = vmatpush2.bf16.msra.mxu0 0
    %151 = vmatprep.mubr.bf16.mxu0 0
    %152 = vmatmul.mubr.bf16.gmra.mxu0 %v52
    %v153 = vpop.f32.mrf.mxu0
    %v154 = vadd.f32 0.0, %v153
    %v155 = vpop.f32.mrf.mxu0
    %v156 = vpop.f32.mrf.mxu0
    %v157 = vadd.f32 0.0, %v156
    %v158 = vpop.f32.mrf.mxu0
    %159 = vdwg.mxu0
    %v160 = vadd.f32 %v53, %v154
    %v161 = vadd.f32 %v54, %v157
    %162 = vst [vmem:[#allocation2] sm:$0xff] %v160
    %163 = vst [vmem:[#allocation2 + $0x8] sm:$0xff] %v161
    // Predicated region
    $region26: #{tpu_custom_call.1} parent=1 // pred_check
      %p164 = pneg %p44
    $region27: #{tpu_custom_call.1} parent=1 // pred_check_branch
      %166 = sbr.rel (%p164) target = $region29
    $region28: #{tpu_custom_call.1} parent=1 // pred_region
      %v167 = vld [vmem:[#allocation2] sm:$0xff]
      %v168 = vld [vmem:[#allocation2 + $0x8] sm:$0xff]
      %v169 = vld [vmem:[%s2] sm:$0x1]
      %v171 = vlaneseq
      %v172 = vshrl.u32 %v171, 7
      %v173 = vsub.s32 0, %v172
      %v174 = vrot.slane %v169, %v173
      %v176 = vadd.f32 %v167, %v174
      %v177 = vadd.f32 %v168, %v174
      %178 = vst [vmem:[#allocation8] sm:$0xff] %v176
      %179 = vst [vmem:[#allocation8 + $0x8] sm:$0xff] %v177
    $region29: #{tpu_custom_call.1} parent=1 // pred_fallthru
      _
    // Predicated region
    $region30: #{tpu_custom_call.1} parent=1 // pred_check
      _
    $region31: #{tpu_custom_call.1} parent=1 // pred_check_branch
      %181 = sbr.rel (0) target = $region33
    $region32: #{tpu_custom_call.1} parent=1 // pred_region
      %s183 = ssub.s32 256, 256
      %184 = vsyncadd [#allocation5], %s183
      %s185 = sshll.u32 [#allocation8], 4
      %s186 = int_to_ptr.vmem [resolvable:$true] %s185
      %191 = dma.vmem_to_hbm [thread:$0]  %s186, 256, %s3, [#allocation5], 128, 128, 8
    $region33: #{tpu_custom_call.1} parent=1 // pred_fallthru
      _
    // Predicated region
    $region34: #{tpu_custom_call.1} parent=1 // pred_check
      _
    $region35: #{tpu_custom_call.1} parent=1 // pred_check_branch
      %193 = sbr.rel (0) target = $region37
    $region36: #{tpu_custom_call.1} parent=1 // pred_region
      %194 = dma.done [#allocation5], 256
    $region37: #{tpu_custom_call.1} parent=1 // pred_fallthru
      _
    %195 = vsyncpa [#allocation4], 1
    %196 = vsyncpa [#allocation7], 1
    %197 = vsyncpa [#allocation5], 1

</llo_original>
